<compile_context>
chip_gen: v7x
topology: tpu7x:2x2x1
jax: 0.10.0
libtpu: 0.0.40
codegen_flags: <defaults>
</compile_context>

<pallas_src>
import jax
import jax.numpy as jnp
from jax.experimental import pallas as pl
from jax.experimental.pallas import tpu as pltpu


def _patch_embed_kernel(p_ref, w_ref, b_ref, o_ref):
    # p_ref: (TM, Kp) patch tile (compute dtype), streamed over the grid.
    # w_ref: (Kp, E)  full weight, constant block index -> resident in VMEM.
    # b_ref: (1, E)   f32 bias, resident.
    # o_ref: (TM, E)  output tile.
    acc = jnp.dot(p_ref[...], w_ref[...],
                  preferred_element_type=jnp.float32)       # MXU, f32 accumulate
    o_ref[...] = (acc + b_ref[...]).astype(o_ref.dtype)     # bias + cast epilogue


def _round_up(a, m):
    return (a + m - 1) // m * m


def patch_embed(x, weight, bias, patch_size, flatten=True,
                compute_dtype=jnp.bfloat16, out_dtype=None):
    """PatchEmbed.forward.

    x      : (B, C, H, W)   -- NCHW, like PyTorch
    weight : (E, C, p, p)   -- nn.Conv2d weight layout
    bias   : (E,)
    returns: (B, nH*nW, E) if flatten else (B, E, nH, nW)
    """
    B, C, H, W = x.shape
    E = weight.shape[0]
    p = patch_size
    nH, nW = H // p, W // p
    K = C * p * p
    M = B * nH * nW
    out_dtype = x.dtype if out_dtype is None else out_dtype

    # --- glue: one fused XLA pass (convert + patch-extract transpose).  The
    # bf16 cast happens before the transpose so the written patch matrix is
    # half-width.  See TODO(synk) above for full in-kernel fusion.
    xc = x.astype(compute_dtype)
    patches = xc.reshape(B, C, nH, p, nW, p)
    patches = patches.transpose(0, 2, 4, 1, 3, 5).reshape(M, K)      # (M, K)

    # Weight transposed ONCE to (K, E) -> plain NN matmul in the kernel.
    w_mat = weight.reshape(E, K).astype(compute_dtype).T             # (K, E)
    b_mat = bias.reshape(1, E).astype(jnp.float32)                   # (1, E)

    # Lane-align the contraction: pad K to a multiple of 128 (zeros => exact).
    Kp = _round_up(K, 128)
    if Kp != K:
        patches = jnp.pad(patches, ((0, 0), (0, Kp - K)))
        w_mat = jnp.pad(w_mat, ((0, Kp - K), (0, 0)))

    # M tile: big (1024) to amortise per-step overhead; small M rounds up to a
    # multiple of 16 (bf16 sublane packing).  No M padding -- cdiv grid.
    TM = 1024 if M >= 1024 else _round_up(M, 16)
    grid = (pl.cdiv(M, TM),)

    # VMEM budget (double-buffered patch + output tiles, resident weight/bias)
    # so larger TM also compiles on v5e's 16 MiB default scoped VMEM while
    # staying far inside v7x's 64 MiB physical VMEM per TensorCore.
    cbytes = jnp.dtype(compute_dtype).itemsize
    obytes = jnp.dtype(out_dtype).itemsize
    vmem_est = (2 * TM * Kp * cbytes      # patch tile, double-buffered
                + 2 * Kp * E * cbytes     # weight (conservatively x2)
                + 2 * E * 4               # bias
                + 2 * TM * E * obytes)    # output tile, double-buffered
    vmem_limit = int(min(max(2 * vmem_est, 32 * 1024 * 1024), 60 * 1024 * 1024))

    out = pl.pallas_call(
        _patch_embed_kernel,
        out_shape=jax.ShapeDtypeStruct((M, E), out_dtype),
        grid=grid,
        in_specs=[
            pl.BlockSpec((TM, Kp), lambda i: (i, 0)),   # streamed patch tile
            pl.BlockSpec((Kp, E), lambda i: (0, 0)),    # resident weight
            pl.BlockSpec((1, E), lambda i: (0, 0)),     # resident bias
        ],
        out_specs=pl.BlockSpec((TM, E), lambda i: (i, 0)),
        compiler_params=pltpu.CompilerParams(
            dimension_semantics=("parallel",),
            vmem_limit_bytes=vmem_limit),
    )(patches, w_mat, b_mat)

    if flatten:
        return out.reshape(B, nH * nW, E)                     # (B, N, E), free reshape
    return out.reshape(B, nH, nW, E).transpose(0, 3, 1, 2)    # (B, E, nH, nW)


if __name__ == "__main__":
    # Small, deterministic configuration consistent with the module.
    B, C, H, W = 2, 4, 16, 16
    patch_size = 8
    embed_dim = 32

    key = jax.random.PRNGKey(0)
    kx, kw, kb = jax.random.split(key, 3)
    x = jax.random.normal(kx, (B, C, H, W), dtype=jnp.float32)
    weight = jax.random.normal(kw, (embed_dim, C, patch_size, patch_size),
                               dtype=jnp.float32) * 0.02
    bias = jax.random.normal(kb, (embed_dim,), dtype=jnp.float32) * 0.02

    out = jax.block_until_ready(patch_embed(x, weight, bias, patch_size))

    # Pure-JAX f32 reference (exact conv-as-matmul semantics).  The kernel
    # uses bf16 operands with f32 accumulation, hence the modest tolerance.
    nH, nW = H // patch_size, W // patch_size
    ref_patches = x.reshape(B, C, nH, patch_size, nW, patch_size)
    ref_patches = ref_patches.transpose(0, 2, 4, 1, 3, 5).reshape(
        B * nH * nW, C * patch_size * patch_size)
    ref = (ref_patches @ weight.reshape(embed_dim, -1).T + bias).reshape(
        B, nH * nW, embed_dim)

    assert out.shape == (B, nH * nW, embed_dim), out.shape
    assert jnp.allclose(out, ref, atol=2e-2, rtol=2e-2), (
        float(jnp.max(jnp.abs(out - ref))))
    print("KERNEL_OK")
</pallas_src>

<mosaic_0001>
module attributes {stable_mosaic.version = 11 : i64} {
  func.func @_patch_embed_kernel(%arg0: i32, %arg1: memref<16x256xbf16, #tpu.memory_space<vmem>>, %arg2: memref<256x32xbf16, #tpu.memory_space<vmem>>, %arg3: memref<1x32xf32, #tpu.memory_space<vmem>>, %arg4: memref<16x32xf32, #tpu.memory_space<vmem>>) attributes {dimension_semantics = [#tpu.dimension_semantics<parallel>], iteration_bounds = array<i64: 1>, scalar_prefetch = 0 : i64, scratch_operands = 0 : i64, tpu.core_type = #tpu.core_type<tc>, window_params = [{transform_indices = @transform_0, window_bounds = array<i64: 16, 256>}, {pipeline_mode = #tpu.pipeline_mode<synchronous>, transform_indices = @transform_1, window_bounds = array<i64: 256, 32>}, {pipeline_mode = #tpu.pipeline_mode<synchronous>, transform_indices = @transform_2, window_bounds = array<i64: 1, 32>}, {transform_indices = @transform_3, window_bounds = array<i64: 16, 32>}]} {
    %c0 = arith.constant 0 : index
    %c0_0 = arith.constant 0 : index
    %0 = vector.load %arg1[%c0, %c0_0] : memref<16x256xbf16, #tpu.memory_space<vmem>>, vector<16x256xbf16>
    %c0_1 = arith.constant 0 : index
    %c0_2 = arith.constant 0 : index
    %1 = vector.load %arg2[%c0_1, %c0_2] : memref<256x32xbf16, #tpu.memory_space<vmem>>, vector<256x32xbf16>
    %cst = arith.constant dense<0.000000e+00> : vector<16x32xf32>
    %2 = tpu.matmul %0, %1, %cst {dimension_numbers = #tpu.dot_dimension_numbers<[1], [0], [0], [1], [0, 0, 1, 1], [], []>} : vector<16x256xbf16>, vector<256x32xbf16>, vector<16x32xf32> -> vector<16x32xf32>
    %c0_3 = arith.constant 0 : index
    %c0_4 = arith.constant 0 : index
    %3 = vector.load %arg3[%c0_3, %c0_4] : memref<1x32xf32, #tpu.memory_space<vmem>>, vector<1x32xf32>
    %4 = vector.broadcast %3 : vector<1x32xf32> to vector<16x32xf32>
    %5 = arith.addf %2, %4 : vector<16x32xf32>
    %c0_5 = arith.constant 0 : index
    %c0_6 = arith.constant 0 : index
    %6 = vector.load %arg4[%c0_5, %c0_6] : memref<16x32xf32, #tpu.memory_space<vmem>>, vector<16x32xf32>
    tpu.vector_store %arg4[%c0_5, %c0_6], %5 {strides = array<i32>} : memref<16x32xf32, #tpu.memory_space<vmem>>, vector<16x32xf32>,
    return
  }
  func.func @transform_0(%arg0: i32) -> (i32, i32) {
    %c0_i32 = arith.constant 0 : i32
    %c0_i32_0 = arith.constant 0 : i32
    return %arg0, %c0_i32 : i32, i32
  }
  func.func @transform_1(%arg0: i32) -> (i32, i32) {
    %c0_i32 = arith.constant 0 : i32
    %c0_i32_0 = arith.constant 0 : i32
    %c0_i32_1 = arith.constant 0 : i32
    return %c0_i32, %c0_i32_0 : i32, i32
  }
  func.func @transform_2(%arg0: i32) -> (i32, i32) {
    %c0_i32 = arith.constant 0 : i32
    %c0_i32_0 = arith.constant 0 : i32
    %c0_i32_1 = arith.constant 0 : i32
    return %c0_i32, %c0_i32_0 : i32, i32
  }
  func.func @transform_3(%arg0: i32) -> (i32, i32) {
    %c0_i32 = arith.constant 0 : i32
    %c0_i32_0 = arith.constant 0 : i32
    return %arg0, %c0_i32 : i32, i32
  }
}

</mosaic_0001>

<llo_original>
// kernel: tpu_custom_call.1
$region0: #{tpu_custom_call.1}
  #allocation0 [shape = 'u32[]', space=smem, size = 0x4, offset = 0x4, fixed_abs, tag = 'smem constant byte address 0x4 - core index']
  #allocation1 [shape = 'u32[144,128]{1,0:T(1,128)}', space=vmem, size = 0x12000, scoped, tag = 'internal scratch']
  %s0 = inlined_call_operand.vmem [shape: bf16[8,256], index: 0, kind: input, shape index: {}]
  %s1 = inlined_call_operand.vmem [shape: bf16[256,32], index: 1, kind: input, shape index: {}]
  %s2 = inlined_call_operand.vmem [shape: f32[1,32], index: 2, kind: input, shape index: {}]
  %s3 = inlined_call_operand.hbm [shape: f32[8,32], index: 3, kind: output, shape index: {}]
  %s4 = sld [smem:[#allocation0]]
  $region22: #{tpu_custom_call.1} parent=0
    _
  %s6 = ssub.s32 1, %s4
  %s7 = scalar_select 0, %s6, %s4
  $region1: #{tpu_custom_call.1} parent=0
    #allocation2 [shape = 'u8[8192]{0}', space=vmem, size = 0x2000, scoped, tag = 'output window, operand 0, single buffered']
    #allocation3 [shape = 's32[1]{0}', space=sflag, size = 0x4, scoped, tag = 'scoped memory for tpu_custom_call.1']
    %8 = vsyncpa [#allocation3], 0
    // Predicated region
    $region2: #{tpu_custom_call.1} parent=1 // pred_check
      _
    $region3: #{tpu_custom_call.1} parent=1 // pred_check_branch
      %10 = sbr.rel (0) target = $region5
    $region4: #{tpu_custom_call.1} parent=1 // pred_region
      _
    $region5: #{tpu_custom_call.1} parent=1 // pred_fallthru
      _
    // Predicated region
    $region6: #{tpu_custom_call.1} parent=1 // pred_check
      _
    $region7: #{tpu_custom_call.1} parent=1 // pred_check_branch
      %12 = sbr.rel (0) target = $region9
    $region8: #{tpu_custom_call.1} parent=1 // pred_region
      _
    $region9: #{tpu_custom_call.1} parent=1 // pred_fallthru
      _
    // Predicated region
    $region10: #{tpu_custom_call.1} parent=1 // pred_check
      _
    $region11: #{tpu_custom_call.1} parent=1 // pred_check_branch
      %14 = sbr.rel (0) target = $region13
    $region12: #{tpu_custom_call.1} parent=1 // pred_region
      _
    $region13: #{tpu_custom_call.1} parent=1 // pred_fallthru
      _
    %v16 = vld [vmem:[%s0] sm:$0xff]
    %v17 = vld [vmem:[%s0 + $0x8] sm:$0xff]
    %v18 = vld [vmem:[%s1] sm:$0xf]
    %v19 = vld [vmem:[%s1 + $0x4] sm:$0xf]
    %v20 = vld [vmem:[%s1 + $0x8] sm:$0xf]
    %v21 = vld [vmem:[%s1 + $0xc] sm:$0xf]
    %v22 = vld [vmem:[%s1 + $0x10] sm:$0xf]
    %v23 = vld [vmem:[%s1 + $0x14] sm:$0xf]
    %v24 = vld [vmem:[%s1 + $0x18] sm:$0xf]
    %v25 = vld [vmem:[%s1 + $0x1c] sm:$0xf]
    %v26 = vld [vmem:[%s1 + $0x20] sm:$0xf]
    %v27 = vld [vmem:[%s1 + $0x24] sm:$0xf]
    %v28 = vld [vmem:[%s1 + $0x28] sm:$0xf]
    %v29 = vld [vmem:[%s1 + $0x2c] sm:$0xf]
    %v30 = vld [vmem:[%s1 + $0x30] sm:$0xf]
    %v31 = vld [vmem:[%s1 + $0x34] sm:$0xf]
    %v32 = vld [vmem:[%s1 + $0x38] sm:$0xf]
    %v33 = vld [vmem:[%s1 + $0x3c] sm:$0xf]
    %v34 = vld [vmem:[%s1 + $0x40] sm:$0xf]
    %v35 = vld [vmem:[%s1 + $0x44] sm:$0xf]
    %v36 = vld [vmem:[%s1 + $0x48] sm:$0xf]
    %v37 = vld [vmem:[%s1 + $0x4c] sm:$0xf]
    %v38 = vld [vmem:[%s1 + $0x50] sm:$0xf]
    %v39 = vld [vmem:[%s1 + $0x54] sm:$0xf]
    %v40 = vld [vmem:[%s1 + $0x58] sm:$0xf]
    %v41 = vld [vmem:[%s1 + $0x5c] sm:$0xf]
    %v42 = vld [vmem:[%s1 + $0x60] sm:$0xf]
    %v43 = vld [vmem:[%s1 + $0x64] sm:$0xf]
    %v44 = vld [vmem:[%s1 + $0x68] sm:$0xf]
    %v45 = vld [vmem:[%s1 + $0x6c] sm:$0xf]
    %v46 = vld [vmem:[%s1 + $0x70] sm:$0xf]
    %v47 = vld [vmem:[%s1 + $0x74] sm:$0xf]
    %v48 = vld [vmem:[%s1 + $0x78] sm:$0xf]
    %v49 = vld [vmem:[%s1 + $0x7c] sm:$0xf]
    %v50 = vld [vmem:[%s2] sm:$0x1]
    %v52 = vlaneseq
    %v53 = vshrl.u32 %v52, 7
    %v54 = vsub.s32 0, %v53
    %v55 = vrot.slane %v50, %v54
    %v59 = vunpack.c.l.b16 %v16
    %v60 = vunpack.c.h.b16 %v16
    %v61 = vunpack.c.l.b16 %v17
    %v62 = vunpack.c.h.b16 %v17
    %v63 = vpack.c.b16 %v61, %v59
    %v64 = vpack.c.b16 %v62, %v60
    %v99 = vunpack.c.l.b16 %v18
    %v100 = vunpack.c.l.b16 %v19
    %v101 = vunpack.c.l.b16 %v20
    %v102 = vunpack.c.l.b16 %v21
    %v103 = vunpack.c.l.b16 %v22
    %v104 = vunpack.c.l.b16 %v23
    %v105 = vunpack.c.l.b16 %v24
    %v106 = vunpack.c.l.b16 %v25
    %v107 = vunpack.c.l.b16 %v26
    %v108 = vunpack.c.l.b16 %v27
    %v109 = vunpack.c.l.b16 %v28
    %v110 = vunpack.c.l.b16 %v29
    %v111 = vunpack.c.l.b16 %v30
    %v112 = vunpack.c.l.b16 %v31
    %v113 = vunpack.c.l.b16 %v32
    %v114 = vunpack.c.l.b16 %v33
    %v115 = vunpack.c.l.b16 %v34
    %v116 = vunpack.c.l.b16 %v35
    %v117 = vunpack.c.l.b16 %v36
    %v118 = vunpack.c.l.b16 %v37
    %v119 = vunpack.c.l.b16 %v38
    %v120 = vunpack.c.l.b16 %v39
    %v121 = vunpack.c.l.b16 %v40
    %v122 = vunpack.c.l.b16 %v41
    %v123 = vunpack.c.l.b16 %v42
    %v124 = vunpack.c.l.b16 %v43
    %v125 = vunpack.c.l.b16 %v44
    %v126 = vunpack.c.l.b16 %v45
    %v127 = vunpack.c.l.b16 %v46
    %v128 = vunpack.c.l.b16 %v47
    %v129 = vunpack.c.l.b16 %v48
    %v130 = vunpack.c.l.b16 %v49
    %v131 = vpack.c.b16 %v100, %v99
    %v132 = vpack.c.b16 %v102, %v101
    %v133 = vpack.c.b16 %v104, %v103
    %v134 = vpack.c.b16 %v106, %v105
    %v135 = vpack.c.b16 %v108, %v107
    %v136 = vpack.c.b16 %v110, %v109
    %v137 = vpack.c.b16 %v112, %v111
    %v138 = vpack.c.b16 %v114, %v113
    %v139 = vpack.c.b16 %v116, %v115
    %v140 = vpack.c.b16 %v118, %v117
    %v141 = vpack.c.b16 %v120, %v119
    %v142 = vpack.c.b16 %v122, %v121
    %v143 = vpack.c.b16 %v124, %v123
    %v144 = vpack.c.b16 %v126, %v125
    %v145 = vpack.c.b16 %v128, %v127
    %v146 = vpack.c.b16 %v130, %v129
    %163 = vmatprep.subr.bf16.mxu0 0
    %164 = vmatpush1.bf16.msra.mxu0 %v131
    %165 = vmatprep.subr.bf16.mxu0 0
    %166 = vmatpush1.bf16.msra.mxu0 %v132
    %167 = vmatprep.subr.bf16.mxu0 0
    %168 = vmatpush1.bf16.msra.mxu0 %v133
    %169 = vmatprep.subr.bf16.mxu0 0
    %170 = vmatpush1.bf16.msra.mxu0 %v134
    %171 = vmatprep.subr.bf16.mxu0 0
    %172 = vmatpush1.bf16.msra.mxu0 %v135
    %173 = vmatprep.subr.bf16.mxu0 0
    %174 = vmatpush1.bf16.msra.mxu0 %v136
    %175 = vmatprep.subr.bf16.mxu0 0
    %176 = vmatpush1.bf16.msra.mxu0 %v137
    %177 = vmatprep.subr.bf16.mxu0 0
    %178 = vmatpush1.bf16.msra.mxu0 %v138
    %179 = vmatprep.subr.bf16.mxu0 0
    %180 = vmatpush1.bf16.msra.mxu0 %v139
    %181 = vmatprep.subr.bf16.mxu0 0
    %182 = vmatpush1.bf16.msra.mxu0 %v140
    %183 = vmatprep.subr.bf16.mxu0 0
    %184 = vmatpush1.bf16.msra.mxu0 %v141
    %185 = vmatprep.subr.bf16.mxu0 0
    %186 = vmatpush1.bf16.msra.mxu0 %v142
    %187 = vmatprep.subr.bf16.mxu0 0
    %188 = vmatpush1.bf16.msra.mxu0 %v143
    %189 = vmatprep.subr.bf16.mxu0 0
    %190 = vmatpush1.bf16.msra.mxu0 %v144
    %191 = vmatprep.subr.bf16.mxu0 0
    %192 = vmatpush1.bf16.msra.mxu0 %v145
    %193 = vmatprep.subr.bf16.mxu0 0
    %194 = vmatpush1.bf16.msra.mxu0 %v146
    %195 = vmatprep.mubr.bf16.mxu0 %v64
    %196 = vmatmul.mubr.bf16.gmra.mrb[0].mxu0 %v63
    %v197 = vpop.f32.mrb[0].mxu0
    %v198 = vadd.f32 %v55, %v197
    %v199 = vpop.f32.mrb[0].mxu0
    %v200 = vpop.f32.mrb[0].mxu0
    %v201 = vadd.f32 %v55, %v200
    %v202 = vpop.f32.mrb[0].mxu0
    %203 = vdwg.mxu0
    %vm204 = vcmask 261120
    %205 = vst.msk [vmem:[#allocation2] sm:$0xff] %vm204, %v198
    %206 = vst.msk [vmem:[#allocation2 + $0x8] sm:$0xff] %vm204, %v201
    // Predicated region
    $region14: #{tpu_custom_call.1} parent=1 // pred_check
      _
    $region15: #{tpu_custom_call.1} parent=1 // pred_check_branch
      %208 = sbr.rel (0) target = $region17
    $region16: #{tpu_custom_call.1} parent=1 // pred_region
      %s210 = ssub.s32 256, 128
      %211 = vsyncadd [#allocation3], %s210
      %s212 = sshll.u32 [#allocation2], 4
      %s213 = int_to_ptr.vmem [resolvable:$true] %s212
      %218 = dma.vmem_to_hbm [thread:$0]  %s213, 128, %s3, [#allocation3], 128, 128, 8
    $region17: #{tpu_custom_call.1} parent=1 // pred_fallthru
      _
    // Predicated region
    $region18: #{tpu_custom_call.1} parent=1 // pred_check
      _
    $region19: #{tpu_custom_call.1} parent=1 // pred_check_branch
      %220 = sbr.rel (0) target = $region21
    $region20: #{tpu_custom_call.1} parent=1 // pred_region
      %221 = dma.done [#allocation3], 256
    $region21: #{tpu_custom_call.1} parent=1 // pred_fallthru
      _
    %222 = vsyncpa [#allocation3], 1

</llo_original>
